<compile_context>
chip_gen: v6e
topology: v6e:2x2x1
jax: 0.10.0
libtpu: 0.0.40
codegen_flags: <defaults>
</compile_context>

<pallas_src>
import jax
import jax.numpy as jnp
from jax.experimental import pallas as pl
from jax.experimental.pallas import tpu as pltpu


def _contrast_kernel(pmod_ref, inmap_ref, out_ref):
    # pmod_ref / inmap_ref: (1, C, TL) in native dtype.
    # out_ref: (1, 8, 128) f32, resident across the lane-tile grid axis
    # (same output block index for every l) -> used directly as accumulator.
    @pl.when(pl.program_id(1) == 0)
    def _():
        out_ref[...] = jnp.zeros_like(out_ref)

    diff = inmap_ref[0].astype(jnp.float32) - pmod_ref[0].astype(jnp.float32)  # (C, TL)
    sq = jnp.sum(diff * diff, axis=0, keepdims=True)                           # (1, TL)
    partial = jnp.sum(jnp.sqrt(sq))                                            # scalar: sum of pixel L2
    out_ref[...] = out_ref[...] + partial


def _nearest_resize_nchw_int(x, out_h, out_w):
    # Matches torch F.interpolate(mode='nearest'): src = floor(dst * in/out).
    # Pure gather, so keep the original (integer) dtype end-to-end.
    _, _, in_h, in_w = x.shape
    hi = jnp.clip(jnp.floor(jnp.arange(out_h) * (in_h / out_h)).astype(jnp.int32), 0, in_h - 1)
    wi = jnp.clip(jnp.floor(jnp.arange(out_w) * (in_w / out_w)).astype(jnp.int32), 0, in_w - 1)
    return x[:, :, hi[:, None], wi[None, :]]


def _round_up(x, m):
    return ((x + m - 1) // m) * m


def _pick_lane_tile(L, C, itemsize, vmem_budget_bytes=8 << 20):
    # 2 inputs x 2 pipeline buffers x (C * TL * itemsize) <= budget.
    max_tl = vmem_budget_bytes // (4 * C * itemsize)
    max_tl = max(128, (max_tl // 128) * 128)
    return min(_round_up(L, 128), max_tl)


def loss_contrast(pmod_feature, inmap_feature, gt_label, label_list, margin=1.0):
    """Forward pass of LossContrast (moldvec=False, pixels_count=False)."""
    B, C, H, W = pmod_feature.shape
    L = H * W

    # --- glue: nearest-neighbor resize of gt + label-set membership (wrapper) ---
    resized = _nearest_resize_nchw_int(gt_label, H, W).astype(jnp.int32)
    init_cond = jnp.zeros(resized.shape, dtype=bool)
    for lab in label_list:
        init_cond = jnp.logical_or(init_cond, resized == int(lab))
    cond = init_cond[:, 0]                                   # (B, H, W) bool

    # pixels_count=False: masks are constant per image -> per-image flags only.
    any_dyn = jnp.any(cond, axis=(1, 2)).astype(jnp.float32)               # image has a dynamic pixel
    dy_cnt = jnp.sum(jnp.all(cond, axis=(1, 2)).astype(jnp.float32))       # fully dynamic images
    st_cnt = jnp.sum(jnp.all(jnp.logical_not(cond), axis=(1, 2)).astype(jnp.float32))

    # --- lane-dense layout: flatten H*W onto the lane axis, pad to the tile ---
    itemsize = max(jnp.dtype(pmod_feature.dtype).itemsize,
                   jnp.dtype(inmap_feature.dtype).itemsize)
    TL = _pick_lane_tile(L, C, itemsize)
    L_pad = _round_up(L, TL)

    def flatten_pad(x):
        x = x.reshape(B, C, L)
        if L_pad != L:
            x = jnp.pad(x, ((0, 0), (0, 0), (0, L_pad - L)))  # zero diff -> zero L2
        return x

    pmod2 = flatten_pad(pmod_feature)      # native dtype; upcast inside the kernel
    inmap2 = flatten_pad(inmap_feature)

    n_l = L_pad // TL
    out = pl.pallas_call(
        _contrast_kernel,
        out_shape=jax.ShapeDtypeStruct((B, 8, 128), jnp.float32),
        grid=(B, n_l),
        in_specs=[pl.BlockSpec((1, C, TL), lambda b, l: (b, 0, l)),
                  pl.BlockSpec((1, C, TL), lambda b, l: (b, 0, l))],
        out_specs=pl.BlockSpec((1, 8, 128), lambda b, l: (b, 0, 0)),
        compiler_params=pltpu.CompilerParams(
            dimension_semantics=("parallel", "arbitrary")),
    )(pmod2, inmap2)

    pix = out[:, 0, 0]                                        # (B,) per-image sum of pixel L2
    static_sum = jnp.sum((1.0 - any_dyn) * pix)
    dynamic_sum = jnp.sum(any_dyn * pix)

    # No zero-guard on st_cnt: matches the torch reference semantics exactly.
    static_loss = static_sum / st_cnt
    dynamic_loss = jnp.where(
        dy_cnt == 0.0, 0.0,
        dynamic_sum / jnp.where(dy_cnt == 0.0, 1.0, dy_cnt))
    return jnp.maximum(static_loss - dynamic_loss + jnp.float32(margin),
                       jnp.float32(0.0))


def _reference(pmod, inmap, cond, margin):
    # pure-JAX mirror of the torch forward (pixels_count=False path)
    any_dyn = jnp.any(cond, axis=(1, 2)).astype(jnp.float32)
    all_dyn = jnp.all(cond, axis=(1, 2)).astype(jnp.float32)
    all_stat = jnp.all(jnp.logical_not(cond), axis=(1, 2)).astype(jnp.float32)
    diff = inmap.astype(jnp.float32) - pmod.astype(jnp.float32)
    l2 = jnp.sqrt(jnp.sum(diff * diff, axis=1))
    pix = jnp.sum(l2, axis=(1, 2))
    static_loss = jnp.sum((1.0 - any_dyn) * pix) / jnp.sum(all_stat)
    dy_cnt = jnp.sum(all_dyn)
    dyn_loss = jnp.where(dy_cnt == 0.0, 0.0,
                         jnp.sum(any_dyn * pix) / jnp.where(dy_cnt == 0.0, 1.0, dy_cnt))
    return jnp.maximum(static_loss - dyn_loss + margin, 0.0)


if __name__ == "__main__":
    key = jax.random.PRNGKey(0)
    B, C, H, W = 2, 4, 16, 16
    Hg, Wg = 32, 32
    k1, k2 = jax.random.split(key)
    pmod = jax.random.normal(k1, (B, C, H, W), jnp.float32)
    inmap = jax.random.normal(k2, (B, C, H, W), jnp.float32)

    # gt_label: batch 0 fully static (label 0), batch 1 fully dynamic (label 1)
    gt_label = jnp.concatenate(
        [jnp.zeros((1, 1, Hg, Wg), jnp.int32),
         jnp.ones((1, 1, Hg, Wg), jnp.int32)], axis=0)
    label_list = [1, 2]
    margin = 1.0

    loss = loss_contrast(pmod, inmap, gt_label, label_list, margin)
    jax.block_until_ready(loss)

    # sanity check against a pure-JAX reference of the same math
    resized = _nearest_resize_nchw_int(gt_label, H, W).astype(jnp.int32)
    cond = jnp.zeros(resized.shape, dtype=bool)
    for lab in label_list:
        cond = jnp.logical_or(cond, resized == lab)
    ref = _reference(pmod, inmap, cond[:, 0], margin)
    if not jnp.allclose(loss, ref, rtol=1e-5, atol=1e-5):
        raise AssertionError(f"mismatch: kernel={loss} ref={ref}")

    print("KERNEL_OK")
</pallas_src>

<mosaic_0001>
module attributes {stable_mosaic.version = 11 : i64} {
  func.func @_contrast_kernel(%arg0: i32, %arg1: i32, %arg2: memref<1x4x256xf32, #tpu.memory_space<vmem>>, %arg3: memref<1x4x256xf32, #tpu.memory_space<vmem>>, %arg4: memref<1x8x128xf32, #tpu.memory_space<vmem>>) attributes {dimension_semantics = [#tpu.dimension_semantics<parallel>, #tpu.dimension_semantics<arbitrary>], iteration_bounds = array<i64: 2, 1>, scalar_prefetch = 0 : i64, scratch_operands = 0 : i64, tpu.core_type = #tpu.core_type<tc>, window_params = [{transform_indices = @transform_0, window_bounds = array<i64: 1, 4, 256>}, {transform_indices = @transform_1, window_bounds = array<i64: 1, 4, 256>}, {transform_indices = @transform_2, window_bounds = array<i64: 1, 8, 128>}]} {
    %c0_i32 = arith.constant 0 : i32
    %0 = arith.cmpi eq, %arg1, %c0_i32 : i32
    %1 = arith.extui %0 : i1 to i32
    %c0_i32_0 = arith.constant 0 : i32
    %2 = arith.cmpi ne, %1, %c0_i32_0 : i32
    scf.if %2 {
      %cst_13 = arith.constant 0.000000e+00 : f32
      %20 = vector.broadcast %cst_13 : f32 to vector<1x8x128xf32>
      %c0_14 = arith.constant 0 : index
      %c0_15 = arith.constant 0 : index
      %c0_16 = arith.constant 0 : index
      %21 = vector.load %arg4[%c0_14, %c0_15, %c0_16] : memref<1x8x128xf32, #tpu.memory_space<vmem>>, vector<1x8x128xf32>
      tpu.vector_store %arg4[%c0_14, %c0_15, %c0_16], %20 {strides = array<i32>} : memref<1x8x128xf32, #tpu.memory_space<vmem>>, vector<1x8x128xf32>,
    } else {
    }
    %c0 = arith.constant 0 : index
    %c0_1 = arith.constant 0 : index
    %c0_2 = arith.constant 0 : index
    %3 = vector.load %arg3[%c0, %c0_1, %c0_2] : memref<1x4x256xf32, #tpu.memory_space<vmem>>, vector<1x4x256xf32>
    %4 = vector.shape_cast %3 : vector<1x4x256xf32> to vector<4x256xf32>
    %c0_3 = arith.constant 0 : index
    %c0_4 = arith.constant 0 : index
    %c0_5 = arith.constant 0 : index
    %5 = vector.load %arg2[%c0_3, %c0_4, %c0_5] : memref<1x4x256xf32, #tpu.memory_space<vmem>>, vector<1x4x256xf32>
    %6 = vector.shape_cast %5 : vector<1x4x256xf32> to vector<4x256xf32>
    %7 = arith.subf %4, %6 : vector<4x256xf32>
    %8 = arith.mulf %7, %7 : vector<4x256xf32>
    %cst = arith.constant dense<0.000000e+00> : vector<256xf32>
    %9 = vector.multi_reduction <add>, %8, %cst [0] : vector<4x256xf32> to vector<256xf32>
    %10 = vector.shape_cast %9 : vector<256xf32> to vector<1x256xf32>
    %11 = math.sqrt %10 : vector<1x256xf32>
    %12 = vector.shape_cast %11 : vector<1x256xf32> to vector<1x1x256xf32>
    %cst_6 = arith.constant dense<0.000000e+00> : vector<1xf32>
    %13 = vector.multi_reduction <add>, %12, %cst_6 [1, 2] : vector<1x1x256xf32> to vector<1xf32>
    %14 = vector.shape_cast %13 : vector<1xf32> to vector<1x1x1xf32>
    %15 = vector.extract %14[0, 0, 0] : f32 from vector<1x1x1xf32>
    %c0_7 = arith.constant 0 : index
    %c0_8 = arith.constant 0 : index
    %c0_9 = arith.constant 0 : index
    %16 = vector.load %arg4[%c0_7, %c0_8, %c0_9] : memref<1x8x128xf32, #tpu.memory_space<vmem>>, vector<1x8x128xf32>
    %17 = vector.broadcast %15 : f32 to vector<1x8x128xf32>
    %18 = arith.addf %16, %17 : vector<1x8x128xf32>
    %c0_10 = arith.constant 0 : index
    %c0_11 = arith.constant 0 : index
    %c0_12 = arith.constant 0 : index
    %19 = vector.load %arg4[%c0_10, %c0_11, %c0_12] : memref<1x8x128xf32, #tpu.memory_space<vmem>>, vector<1x8x128xf32>
    tpu.vector_store %arg4[%c0_10, %c0_11, %c0_12], %18 {strides = array<i32>} : memref<1x8x128xf32, #tpu.memory_space<vmem>>, vector<1x8x128xf32>,
    return
  }
  func.func @transform_0(%arg0: i32, %arg1: i32) -> (i32, i32, i32) {
    %c0_i32 = arith.constant 0 : i32
    %c0_i32_0 = arith.constant 0 : i32
    return %arg0, %c0_i32, %arg1 : i32, i32, i32
  }
  func.func @transform_1(%arg0: i32, %arg1: i32) -> (i32, i32, i32) {
    %c0_i32 = arith.constant 0 : i32
    %c0_i32_0 = arith.constant 0 : i32
    return %arg0, %c0_i32, %arg1 : i32, i32, i32
  }
  func.func @transform_2(%arg0: i32, %arg1: i32) -> (i32, i32, i32) {
    %c0_i32 = arith.constant 0 : i32
    %c0_i32_0 = arith.constant 0 : i32
    %c0_i32_1 = arith.constant 0 : i32
    return %arg0, %c0_i32, %c0_i32_0 : i32, i32, i32
  }
}

</mosaic_0001>

<llo_original>
// kernel: tpu_custom_call.1
$region0: #{tpu_custom_call.1}
  #allocation0 [shape = 'u32[]', space=smem, size = 0x4, offset = 0x4, fixed_abs, tag = 'smem constant byte address 0x4 - core index']
  #allocation1 [shape = 'u32[144,128]{1,0:T(1,128)}', space=vmem, size = 0x12000, scoped, tag = 'internal scratch']
  %s0 = inlined_call_operand.hbm [shape: f32[2,4,256], index: 0, kind: input, shape index: {}]
  %s1 = inlined_call_operand.hbm [shape: f32[2,4,256], index: 1, kind: input, shape index: {}]
  %s2 = inlined_call_operand.hbm [shape: f32[2,8,128], index: 2, kind: output, shape index: {}]
  %s3 = sld [smem:[#allocation0]]
  $region53: #{tpu_custom_call.1} parent=0
    _
  %s5 = ssub.s32 1, %s3
  %s6 = scalar_select 0, %s5, %s3
  $region1: #{tpu_custom_call.1} parent=0
    #allocation2 [shape = 'u8[8192]{0}', space=vmem, size = 0x2000, scoped, tag = 'input window, operand 0']
    #allocation3 [shape = 's32[2]{0}', space=sflag, size = 0x8, scoped, tag = 'scoped memory for tpu_custom_call.1']
    #allocation4 [shape = 's32[2]{0}', space=sflag, size = 0x8, scoped, tag = 'scoped memory for tpu_custom_call.1']
    #allocation5 [shape = 'u8[8192]{0}', space=vmem, size = 0x2000, scoped, tag = 'input window, operand 1']
    #allocation6 [shape = 's32[2]{0}', space=sflag, size = 0x8, scoped, tag = 'scoped memory for tpu_custom_call.1']
    #allocation7 [shape = 'u8[8192]{0}', space=vmem, size = 0x2000, scoped, tag = 'output window, operand 0']
    %7 = vsyncpa [#allocation3], 0
    %s8 = scalar_lea.sflag [#allocation3], 1
    %9 = vsyncpa %s8, 0
    %10 = vsyncpa [#allocation6], 0
    %s11 = scalar_lea.sflag [#allocation6], 1
    %12 = vsyncpa %s11, 0
    %13 = vsyncpa [#allocation4], 0
    %s14 = scalar_lea.sflag [#allocation4], 1
    %15 = vsyncpa %s14, 0
    loop: start=0, step=1, limit=4
    $region2: #{tpu_custom_call.1} parent=1 // loop_pre_header
      _
    $region3: #{tpu_custom_call.1} parent=1 // loop_header
      %s17 = sphi 0, %s21
      %p18 = scmp.ge.s32.totalorder %s17, 4
      %s24 = sphi 0, %s36
      %s25 = sphi 0, %s32
      %s26 = sphi 0, %s24
      %s27 = sphi 0, %s25
      %s28 = sphi 0, %s26
      %s29 = sphi 0, %s27
      %s41 = sphi 0, %s43
      %s44 = sphi 0, %s41
      %s45 = sphi 0, %s44
      %s61 = sphi 0, %s45
      %s69 = sphi 0, %s71
      %s72 = sphi 0, %s69
      %s73 = sphi 0, %s72
      %s89 = sphi 0, %s73
      %s95 = sphi 0, %s97
      %s98 = sphi 0, %s95
      %s99 = sphi 0, %s98
      %s115 = sphi 0, %s99
    $region4: #{tpu_custom_call.1} parent=1 // loop_header_branch
      %20 = sbr.rel (%p18) target = $region8
    $region5: #{tpu_custom_call.1} parent=1 // loop_body
      %s22 = ssub.s32 %s17, 1
      %s23 = ssub.s32 %s17, 2
      %s30 = sadd.s32 1, %s25
      %p31 = scmp.ge.s32.totalorder %s30, 1
      %s32 = scalar_select %p31, 0, %s30
      %s33 = sadd.s32 1, %s24
      %s34 = scalar_select %p31, %s33, %s24
      %p35 = scmp.ge.s32.totalorder %s34, 2
      %s36 = scalar_select %p35, 0, %s34
      %s37 = ssub.s32 %s24, %s36
      %s38 = ssub.s32 %s25, %s32
      %s39 = sor.u32 %s37, %s38
      %p40 = scmp.eq.s32.totalorder %s39, 0
      %s42 = sadd.s32 %s41, 1
      %s43 = scalar_select %p40, %s41, %s42
      %p46 = pneg %p40
      %p47 = scmp.eq.s32.totalorder %s17, 1
      %p48 = por %p46, %p47
      %p49 = scmp.ne.s32.totalorder %s41, %s44
      %p50 = scmp.eq.s32.totalorder %s17, 0
      %p51 = por %p49, %p50
      %p52 = scmp.ne.s32.totalorder %s41, %s44
      %p53 = scmp.eq.s32.totalorder %s22, 1
      %p54 = por %p52, %p53
      %p55 = scmp.ne.s32.totalorder %s44, %s45
      %p56 = scmp.eq.s32.totalorder %s22, 0
      %p57 = por %p55, %p56
      %p58 = scmp.ne.s32.totalorder %s44, %s45
      %p59 = scmp.eq.s32.totalorder %s23, 1
      %p60 = por %p58, %p59
      %p62 = scmp.ne.s32.totalorder %s45, %s61
      %p63 = scmp.eq.s32.totalorder %s23, 0
      %p64 = por %p62, %p63
      %s65 = ssub.s32 %s24, %s36
      %s66 = ssub.s32 %s25, %s32
      %s67 = sor.u32 %s65, %s66
      %p68 = scmp.eq.s32.totalorder %s67, 0
      %s70 = sadd.s32 %s69, 1
      %s71 = scalar_select %p68, %s69, %s70
      %p74 = pneg %p68
      %p75 = scmp.eq.s32.totalorder %s17, 1
      %p76 = por %p74, %p75
      %p77 = scmp.ne.s32.totalorder %s69, %s72
      %p78 = scmp.eq.s32.totalorder %s17, 0
      %p79 = por %p77, %p78
      %p80 = scmp.ne.s32.totalorder %s69, %s72
      %p81 = scmp.eq.s32.totalorder %s22, 1
      %p82 = por %p80, %p81
      %p83 = scmp.ne.s32.totalorder %s72, %s73
      %p84 = scmp.eq.s32.totalorder %s22, 0
      %p85 = por %p83, %p84
      %p86 = scmp.ne.s32.totalorder %s72, %s73
      %p87 = scmp.eq.s32.totalorder %s23, 1
      %p88 = por %p86, %p87
      %p90 = scmp.ne.s32.totalorder %s73, %s89
      %p91 = scmp.eq.s32.totalorder %s23, 0
      %p92 = por %p90, %p91
      %s93 = ssub.s32 %s24, %s36
      %p94 = scmp.eq.s32.totalorder %s93, 0
      %s96 = sadd.s32 %s95, 1
      %s97 = scalar_select %p94, %s95, %s96
      %p100 = pneg %p94
      %p101 = scmp.eq.s32.totalorder %s17, 1
      %p102 = por %p100, %p101
      %p103 = scmp.ne.s32.totalorder %s95, %s98
      %p104 = scmp.eq.s32.totalorder %s17, 0
      %p105 = por %p103, %p104
      %p106 = scmp.ne.s32.totalorder %s95, %s98
      %p107 = scmp.eq.s32.totalorder %s22, 1
      %p108 = por %p106, %p107
      %p109 = scmp.ne.s32.totalorder %s98, %s99
      %p110 = scmp.eq.s32.totalorder %s22, 0
      %p111 = por %p109, %p110
      %p112 = scmp.ne.s32.totalorder %s98, %s99
      %p113 = scmp.eq.s32.totalorder %s23, 1
      %p114 = por %p112, %p113
      %p116 = scmp.ne.s32.totalorder %s99, %s115
      %p117 = scmp.eq.s32.totalorder %s23, 0
      %p118 = por %p116, %p117
      %p119 = scmp.le.s32.totalorder 1, %s17
      %p120 = scmp.lt.s32.totalorder %s17, 3
      %p121 = pnand %p119, %p120
      %p122 = pneg %p121
      // Predicated region
      $region9: #{tpu_custom_call.1} parent=5 // pred_check
        _
      $region10: #{tpu_custom_call.1} parent=5 // pred_check_branch
        %124 = sbr.rel (%p121) target = $region12
      $region11: #{tpu_custom_call.1} parent=5 // pred_region
        %s125 = ssub.s32 %s17, 1
      $region12: #{tpu_custom_call.1} parent=5 // pred_fallthru
        _
      %p126 = scmp.lt.s32.totalorder %s17, 2
      // Predicated region
      $region13: #{tpu_custom_call.1} parent=5 // pred_check
        %p127 = pneg %p126
      $region14: #{tpu_custom_call.1} parent=5 // pred_check_branch
        %129 = sbr.rel (%p127) target = $region16
      $region15: #{tpu_custom_call.1} parent=5 // pred_region
        // Predicated region
        $region17: #{tpu_custom_call.1} parent=15 // pred_check
          %p130 = pneg %p51
        $region18: #{tpu_custom_call.1} parent=15 // pred_check_branch
          %132 = sbr.rel (%p130) target = $region20
        $region19: #{tpu_custom_call.1} parent=15 // pred_region
          %s133 = sand.u32 %s41, 1
          %s134 = scalar_lea.sflag [#allocation3], %s133
          %s135 = sand.u32 %s41, 1
          %s136 = smul.addr %s135, 8
          %s137 = scalar_lea.vmem [#allocation2], %s136
          %s138 = smul.u32 2, %s25
          %s140 = ssub.s32 128, 128
          %141 = vsyncadd %s134, %s140
          %s142 = smul.addr %s24, 2
          %s143 = sadd.s32 %s138, %s142
          %s144 = smul.addr %s143, 64
          %s145 = scalar_lea.hbm %s0, %s144
          %s147 = sshll.u32 %s137, 4
          %s148 = int_to_ptr.vmem [resolvable:$true] %s147
          %150 = dma.hbm_to_vmem [thread:$0]  %s145, 128, %s148, %s134
        $region20: #{tpu_custom_call.1} parent=15 // pred_fallthru
          _
        // Predicated region
        $region21: #{tpu_custom_call.1} parent=15 // pred_check
          %p151 = pneg %p79
        $region22: #{tpu_custom_call.1} parent=15 // pred_check_branch
          %153 = sbr.rel (%p151) target = $region24
        $region23: #{tpu_custom_call.1} parent=15 // pred_region
          %s154 = sand.u32 %s69, 1
          %s155 = scalar_lea.sflag [#allocation6], %s154
          %s156 = sand.u32 %s69, 1
          %s157 = smul.addr %s156, 8
          %s158 = scalar_lea.vmem [#allocation5], %s157
          %s159 = smul.u32 2, %s25
          %s161 = ssub.s32 128, 128
          %162 = vsyncadd %s155, %s161
          %s163 = smul.addr %s24, 2
          %s164 = sadd.s32 %s159, %s163
          %s165 = smul.addr %s164, 64
          %s166 = scalar_lea.hbm %s1, %s165
          %s168 = sshll.u32 %s158, 4
          %s169 = int_to_ptr.vmem [resolvable:$true] %s168
          %171 = dma.hbm_to_vmem [thread:$0]  %s166, 128, %s169, %s155
        $region24: #{tpu_custom_call.1} parent=15 // pred_fallthru
          _
      $region16: #{tpu_custom_call.1} parent=5 // pred_fallthru
        _
      %p172 = scmp.le.s32.totalorder 1, %s17
      %p173 = scmp.lt.s32.totalorder %s17, 3
      %p174 = pnand %p172, %p173
      %p175 = pneg %p174
      // Predicated region
      $region25: #{tpu_custom_call.1} parent=5 // pred_check
        _
      $region26: #{tpu_custom_call.1} parent=5 // pred_check_branch
        %177 = sbr.rel (%p174) target = $region28
      $region27: #{tpu_custom_call.1} parent=5 // pred_region
        %s178 = ssub.s32 %s17, 1
        %s179 = sand.u32 %s44, 1
        %s180 = scalar_lea.sflag [#allocation3], %s179
        %s181 = sand.u32 %s44, 1
        %s182 = smul.addr %s181, 8
        %s183 = scalar_lea.vmem [#allocation2], %s182
        // Predicated region
        $region29: #{tpu_custom_call.1} parent=27 // pred_check
          %p184 = pneg %p57
        $region30: #{tpu_custom_call.1} parent=27 // pred_check_branch
          %186 = sbr.rel (%p184) target = $region32
        $region31: #{tpu_custom_call.1} parent=27 // pred_region
          %187 = dma.done %s180, 128
        $region32: #{tpu_custom_call.1} parent=27 // pred_fallthru
          _
        %s188 = sand.u32 %s72, 1
        %s189 = scalar_lea.sflag [#allocation6], %s188
        %s190 = sand.u32 %s72, 1
        %s191 = smul.addr %s190, 8
        %s192 = scalar_lea.vmem [#allocation5], %s191
        // Predicated region
        $region33: #{tpu_custom_call.1} parent=27 // pred_check
          %p193 = pneg %p85
        $region34: #{tpu_custom_call.1} parent=27 // pred_check_branch
          %195 = sbr.rel (%p193) target = $region36
        $region35: #{tpu_custom_call.1} parent=27 // pred_region
          %196 = dma.done %s189, 128
        $region36: #{tpu_custom_call.1} parent=27 // pred_fallthru
          _
        %s197 = sand.u32 %s44, 1
        %s198 = scalar_lea.sflag [#allocation3], %s197
        %s199 = sand.u32 %s44, 1
        %s200 = smul.addr %s199, 8
        %s201 = scalar_lea.vmem [#allocation2], %s200
        %p202 = pneg %p57
        %p203 = pneg %p54
        %s204 = sand.u32 %s72, 1
        %s205 = scalar_lea.sflag [#allocation6], %s204
        %s206 = sand.u32 %s72, 1
        %s207 = smul.addr %s206, 8
        %s208 = scalar_lea.vmem [#allocation5], %s207
        %p209 = pneg %p85
        %p210 = pneg %p82
        %p211 = pneg %p111
        %p212 = pneg %p108
        %s213 = sand.u32 %s98, 1
        %s214 = scalar_lea.sflag [#allocation4], %s213
        %s215 = sand.u32 %s98, 1
        %s216 = smul.addr %s215, 8
        %s217 = scalar_lea.vmem [#allocation7], %s216
        %s218 = smul.u32 2, %s27
        %s219 = smul.u32 2, %s27
        %p220 = scmp.eq.s32.totalorder %s27, 0
        // Predicated region
        $region37: #{tpu_custom_call.1} parent=27 // pred_check
          %p221 = pneg %p220
        $region38: #{tpu_custom_call.1} parent=27 // pred_check_branch
          %223 = sbr.rel (%p221) target = $region40
        $region39: #{tpu_custom_call.1} parent=27 // pred_region
          %224 = vst [vmem:[%s217] sm:$0xff] 0.0
        $region40: #{tpu_custom_call.1} parent=27 // pred_fallthru
          _
        %v225 = vld [vmem:[%s192] sm:$0xff]
        %v226 = vld [vmem:[%s183] sm:$0xff]
        %v227 = vsub.f32 %v225, %v226
        %v228 = vmul.f32 %v227, %v227
        %v230 = vcombine.high %v228, %v228
        %vm232 = vcmask 1043456
        %v233 = vsel %vm232, %v228, 0.0
        %v234 = vrot.slane %v233, 4
        %v235 = vadd.f32 %v233, %v234
        %v236 = vrot.slane %v235, 2
        %v237 = vadd.f32 %v235, %v236
        %v238 = vrot.slane %v237, 1
        %v239 = vadd.f32 %v237, %v238
        %v240 = vsel %vm232, %v230, 0.0
        %v241 = vrot.slane %v240, 4
        %v242 = vadd.f32 %v240, %v241
        %v243 = vrot.slane %v242, 2
        %v244 = vadd.f32 %v242, %v243
        %v245 = vrot.slane %v244, 1
        %v246 = vadd.f32 %v244, %v245
        %v247 = vrsqrt.pop %v239
        %v248 = vmul.f32 %v239, %v247
        %vm249 = vcmp.eq.f32.partialorder %v239, inf
        %v250 = vsel %vm249, %v239, %v248
        %vm251 = vcmp.eq.f32.partialorder %v239, 0.0
        %v252 = vand.u32 %v239, 2147483648
        %v253 = vsel %vm251, %v252, %v250
        %v254 = vrsqrt.pop %v246
        %v255 = vmul.f32 %v246, %v254
        %vm256 = vcmp.eq.f32.partialorder %v246, inf
        %v257 = vsel %vm256, %v246, %v255
        %vm258 = vcmp.eq.f32.partialorder %v246, 0.0
        %v259 = vand.u32 %v246, 2147483648
        %v260 = vsel %vm258, %v259, %v257
        %vm261 = vcmask 1040384
        %v262 = vsel %vm261, %v253, 0.0
        %v263 = vsel %vm261, %v260, 0.0
        %v264 = vadd.f32 %v262, %v263
        %265 = vadd.xlane.f32.xlu0 %v264
        %v266 = vpop.xlane.xlu0 %265
        %v267 = vrot.slane %v266, 4
        %v268 = vadd.f32 %v266, %v267
        %v269 = vrot.slane %v268, 2
        %v270 = vadd.f32 %v268, %v269
        %v271 = vrot.slane %v270, 1
        %v272 = vadd.f32 %v270, %v271
        %s273 = vtos %v272
        %v274 = vld [vmem:[%s217] sm:$0xff]
        %v275 = vstv %s273
        %v276 = vadd.f32 %v274, %v275
        %277 = vst [vmem:[%s217] sm:$0xff] %v276
        %s278 = sand.u32 %s98, 1
        %s279 = scalar_lea.sflag [#allocation4], %s278
        %s280 = sand.u32 %s98, 1
        %s281 = smul.addr %s280, 8
        %s282 = scalar_lea.vmem [#allocation7], %s281
        // Predicated region
        $region41: #{tpu_custom_call.1} parent=27 // pred_check
          %p283 = pneg %p108
        $region42: #{tpu_custom_call.1} parent=27 // pred_check_branch
          %285 = sbr.rel (%p283) target = $region44
        $region43: #{tpu_custom_call.1} parent=27 // pred_region
          %s287 = ssub.s32 128, 128
          %288 = vsyncadd %s279, %s287
          %s289 = smul.addr %s26, 128
          %s290 = scalar_lea.hbm %s2, %s289
          %s292 = sshll.u32 %s282, 4
          %s293 = int_to_ptr.vmem [resolvable:$true] %s292
          %295 = dma.vmem_to_hbm [thread:$0]  %s293, 128, %s290, %s279
        $region44: #{tpu_custom_call.1} parent=27 // pred_fallthru
          _
      $region28: #{tpu_custom_call.1} parent=5 // pred_fallthru
        _
      %p296 = scmp.le.s32.totalorder 2, %s17
      // Predicated region
      $region45: #{tpu_custom_call.1} parent=5 // pred_check
        %p297 = pneg %p296
      $region46: #{tpu_custom_call.1} parent=5 // pred_check_branch
        %299 = sbr.rel (%p297) target = $region48
      $region47: #{tpu_custom_call.1} parent=5 // pred_region
        %s300 = ssub.s32 %s17, 2
        // Predicated region
        $region49: #{tpu_custom_call.1} parent=47 // pred_check
          %p301 = pneg %p114
        $region50: #{tpu_custom_call.1} parent=47 // pred_check_branch
          %303 = sbr.rel (%p301) target = $region52
        $region51: #{tpu_custom_call.1} parent=47 // pred_region
          %s304 = sand.u32 %s99, 1
          %s305 = scalar_lea.sflag [#allocation4], %s304
          %s306 = sand.u32 %s99, 1
          %s307 = smul.addr %s306, 8
          %s308 = scalar_lea.vmem [#allocation7], %s307
          %309 = dma.done %s305, 128
        $region52: #{tpu_custom_call.1} parent=47 // pred_fallthru
          _
      $region48: #{tpu_custom_call.1} parent=5 // pred_fallthru
        _
    $region6: #{tpu_custom_call.1} parent=1 // loop_footer
      %s21 = sadd.s32 1, %s17
    $region7: #{tpu_custom_call.1} parent=1 // loop_footer_branch
      %16 = sbr.rel target = $region3
    $region8: #{tpu_custom_call.1} parent=1 // loop_exit
      _
    %310 = vsyncpa [#allocation3], 1
    %s311 = scalar_lea.sflag [#allocation3], 1
    %312 = vsyncpa %s311, 1
    %313 = vsyncpa [#allocation6], 1
    %s314 = scalar_lea.sflag [#allocation6], 1
    %315 = vsyncpa %s314, 1
    %316 = vsyncpa [#allocation4], 1
    %s317 = scalar_lea.sflag [#allocation4], 1
    %318 = vsyncpa %s317, 1

</llo_original>
